<compile_context>
chip_gen: v7x
topology: tpu7x:2x2x1
jax: 0.10.0
libtpu: 0.0.40
codegen_flags: <defaults>
</compile_context>

<pallas_src>
import math
from functools import lru_cache, partial

import numpy as np
import jax
import jax.numpy as jnp
from jax.experimental import pallas as pl
from jax.experimental.pallas import tpu as pltpu

_A = -0.75  # PyTorch bicubic coefficient


def _cubic1(x):
    return ((_A + 2.0) * x - (_A + 3.0)) * x * x + 1.0


def _cubic2(x):
    return ((_A * x - 5.0 * _A) * x + 8.0 * _A) * x - 4.0 * _A


@lru_cache(maxsize=None)
def bicubic_weight_matrix(in_size: int, out_size: int) -> np.ndarray:
    """(out_size, in_size) matrix reproducing torch bicubic, align_corners=False."""
    scale = in_size / out_size
    dst = np.arange(out_size, dtype=np.float64)
    src = (dst + 0.5) * scale - 0.5
    x0 = np.floor(src)
    t = src - x0
    coeffs = np.stack(
        [_cubic2(t + 1.0), _cubic1(t), _cubic1(1.0 - t), _cubic2(2.0 - t)], axis=1
    )  # (out, 4)
    idx = x0[:, None].astype(np.int64) + np.arange(-1, 3)[None, :]
    idx = np.clip(idx, 0, in_size - 1)  # torch clamps border taps
    W = np.zeros((out_size, in_size), dtype=np.float64)
    np.add.at(W, (np.arange(out_size)[:, None], idx), coeffs)
    return W.astype(np.float32)


def _resize2d_kernel(x_ref, wh_ref, wbd_ref, o_ref):
    # x_ref  : (in_h, Bp*in_w)      Bp planes laid side-by-side along the lanes
    # wh_ref : (out_h, in_h)        height-resize weights
    # wbd_ref: (Bp*in_w, Bp*out_w)  block-diagonal width weights kron(I_Bp, W_w^T)
    # o_ref  : (out_h, Bp*out_w)    lane-dense output slab
    t = jnp.dot(wh_ref[...], x_ref[...], preferred_element_type=jnp.float32)
    o_ref[...] = jnp.dot(t, wbd_ref[...], preferred_element_type=jnp.float32)


def _choose_bp(p, in_h, in_w, out_h, out_w):
    """Planes per block: folded lane dims >=~256, 128-aligned, VMEM-budgeted."""
    target = 256  # v6e/v7x MXU tile; also covers v5e's 128 alignment
    need = max(1, -(-target // min(in_w, out_w)))
    align = math.lcm(128 // math.gcd(128, in_w), 128 // math.gcd(128, out_w))
    bp = -(-need // align) * align

    def block_bytes(b):
        return 4 * (2 * in_h * b * in_w          # double-buffered input slab
                    + 2 * out_h * b * out_w      # double-buffered output slab
                    + out_h * in_h               # height weights
                    + (b * in_w) * (b * out_w))  # block-diag width weights

    budget = 24 * 1024 * 1024  # headroom vs v7x's 64 MiB physical VMEM
    while bp > align and block_bytes(bp) > budget:
        bp -= align
    if bp >= p:
        bp = p  # single block == full array: any block shape is legal
    return bp, block_bytes(bp)


def bicubic_resize(x: jnp.ndarray, out_h: int, out_w: int) -> jnp.ndarray:
    """Bicubic resize of an NCHW tensor via a single Pallas call (2 matmuls/block)."""
    n, c, in_h, in_w = x.shape
    p = n * c
    bp, needed = _choose_bp(p, in_h, in_w, out_h, out_w)
    p_pad = -(-p // bp) * bp

    xf = x.reshape(p, in_h, in_w).astype(jnp.float32)
    if p_pad != p:
        xf = jnp.pad(xf, ((0, p_pad - p), (0, 0), (0, 0)))
    # Lay all planes side by side along the lane axis: (in_h, P*in_w).
    x2 = jnp.transpose(xf, (1, 0, 2)).reshape(in_h, p_pad * in_w)

    wh = jnp.asarray(bicubic_weight_matrix(in_h, out_h))            # (out_h, in_h)
    wwt = bicubic_weight_matrix(in_w, out_w).T                      # (in_w, out_w)
    wbd = jnp.asarray(np.kron(np.eye(bp, dtype=np.float32), wwt))   # (bp*in_w, bp*out_w)

    vmem_limit = int(min(max(2 * needed, 16 * 1024 * 1024), 48 * 1024 * 1024))
    # TODO(synk): for very large H/W (single-plane block > ~24 MiB) an extra
    # out_h tiling grid axis would be needed to stay inside v7x's 64 MiB VMEM.

    out2 = pl.pallas_call(
        _resize2d_kernel,
        out_shape=jax.ShapeDtypeStruct((out_h, p_pad * out_w), jnp.float32),
        grid=(p_pad // bp,),
        in_specs=[
            pl.BlockSpec((in_h, bp * in_w), lambda b: (0, b)),
            pl.BlockSpec((out_h, in_h), lambda b: (0, 0)),
            pl.BlockSpec((bp * in_w, bp * out_w), lambda b: (0, 0)),
        ],
        out_specs=pl.BlockSpec((out_h, bp * out_w), lambda b: (0, b)),
        compiler_params=pltpu.CompilerParams(
            dimension_semantics=("parallel",),
            vmem_limit_bytes=vmem_limit,
        ),
    )(x2, wh, wbd)

    # Un-interleave the lane-packed planes back to (N, C, out_h, out_w).
    out = out2.reshape(out_h, p_pad, out_w).transpose(1, 0, 2)[:p]
    return out.reshape(n, c, out_h, out_w)


@partial(jax.jit, static_argnames=("resize_ratio", "back_ratio"))
def resize_cropout(image, cover_image, key, resize_ratio=0.5, back_ratio=0.67):
    """Forward pass of ResizeCropout. image/cover_image: NCHW float arrays."""
    assert resize_ratio <= back_ratio
    n, c, h, w = image.shape
    down_h, down_w = int(resize_ratio * h), int(resize_ratio * w)
    back_h, back_w = int(back_ratio * h), int(back_ratio * w)

    k_perm, k_h, k_w = jax.random.split(key, 3)

    down_image = bicubic_resize(image, down_h, down_w)
    background = bicubic_resize(cover_image, back_h, back_w)

    # torch.randperm(batch) analogue.
    perm = jax.random.permutation(k_perm, n)
    background = background[perm]

    # get_random_rectangle_inside: traced scalars, no host sync (jit-safe).
    h_start = (jnp.int32(0) if back_h == down_h
               else jax.random.randint(k_h, (), 0, back_h - down_h, dtype=jnp.int32))
    w_start = (jnp.int32(0) if back_w == down_w
               else jax.random.randint(k_w, (), 0, back_w - down_w, dtype=jnp.int32))

    # TODO(synk): the permutation gather + rectangle stitch could be fused into the
    # final resize pallas_call via PrefetchScalarGridSpec (prefetch perm / h_start /
    # w_start) to save the extra HBM passes; kept as XLA glue for lowering robustness.
    stitch = jax.lax.dynamic_update_slice(
        background, down_image, (jnp.int32(0), jnp.int32(0), h_start, w_start))

    up_image = bicubic_resize(stitch, h, w)
    return up_image


if __name__ == "__main__":
    key = jax.random.PRNGKey(0)
    k_img, k_cov, k_noise = jax.random.split(key, 3)

    # Small, module-consistent shapes: batch=2, channels=3, spatial=16x16.
    image = jax.random.normal(k_img, (2, 3, 16, 16), dtype=jnp.float32)
    cover_image = jax.random.normal(k_cov, (2, 3, 16, 16), dtype=jnp.float32)

    # Spot-check the Pallas resize against a dense einsum using the same weights.
    chk = bicubic_resize(image, 8, 8)
    wh_ref = jnp.asarray(bicubic_weight_matrix(16, 8))
    ww_ref = jnp.asarray(bicubic_weight_matrix(16, 8))
    ref = jnp.einsum("ah,nchw,bw->ncab", wh_ref, image, ww_ref,
                     precision=jax.lax.Precision.HIGHEST)
    assert bool(jnp.allclose(chk, ref, atol=1e-3, rtol=1e-3)), \
        float(jnp.abs(chk - ref).max())

    out = resize_cropout(image, cover_image, k_noise,
                         resize_ratio=0.5, back_ratio=0.67)
    out = jax.block_until_ready(out)
    assert out.shape == image.shape, out.shape
    assert bool(jnp.isfinite(out).all())
    print("KERNEL_OK")
</pallas_src>

<mosaic_0001>
module attributes {stable_mosaic.version = 11 : i64} {
  func.func @_resize2d_kernel(%arg0: i32, %arg1: memref<16x96xf32, #tpu.memory_space<vmem>>, %arg2: memref<8x16xf32, #tpu.memory_space<vmem>>, %arg3: memref<96x48xf32, #tpu.memory_space<vmem>>, %arg4: memref<8x48xf32, #tpu.memory_space<vmem>>) attributes {dimension_semantics = [#tpu.dimension_semantics<parallel>], iteration_bounds = array<i64: 1>, scalar_prefetch = 0 : i64, scratch_operands = 0 : i64, tpu.core_type = #tpu.core_type<tc>, window_params = [{transform_indices = @transform_0, window_bounds = array<i64: 16, 96>}, {pipeline_mode = #tpu.pipeline_mode<synchronous>, transform_indices = @transform_1, window_bounds = array<i64: 8, 16>}, {pipeline_mode = #tpu.pipeline_mode<synchronous>, transform_indices = @transform_2, window_bounds = array<i64: 96, 48>}, {transform_indices = @transform_3, window_bounds = array<i64: 8, 48>}]} {
    %c0 = arith.constant 0 : index
    %c0_0 = arith.constant 0 : index
    %0 = vector.load %arg2[%c0, %c0_0] : memref<8x16xf32, #tpu.memory_space<vmem>>, vector<8x16xf32>
    %c0_1 = arith.constant 0 : index
    %c0_2 = arith.constant 0 : index
    %1 = vector.load %arg1[%c0_1, %c0_2] : memref<16x96xf32, #tpu.memory_space<vmem>>, vector<16x96xf32>
    %cst = arith.constant dense<0.000000e+00> : vector<8x96xf32>
    %2 = tpu.matmul %0, %1, %cst {dimension_numbers = #tpu.dot_dimension_numbers<[1], [0], [0], [1], [0, 0, 1, 1], [], []>} : vector<8x16xf32>, vector<16x96xf32>, vector<8x96xf32> -> vector<8x96xf32>
    %c0_3 = arith.constant 0 : index
    %c0_4 = arith.constant 0 : index
    %3 = vector.load %arg3[%c0_3, %c0_4] : memref<96x48xf32, #tpu.memory_space<vmem>>, vector<96x48xf32>
    %cst_5 = arith.constant dense<0.000000e+00> : vector<8x48xf32>
    %4 = tpu.matmul %2, %3, %cst_5 {dimension_numbers = #tpu.dot_dimension_numbers<[1], [0], [0], [1], [0, 0, 1, 1], [], []>} : vector<8x96xf32>, vector<96x48xf32>, vector<8x48xf32> -> vector<8x48xf32>
    %c0_6 = arith.constant 0 : index
    %c0_7 = arith.constant 0 : index
    %5 = vector.load %arg4[%c0_6, %c0_7] : memref<8x48xf32, #tpu.memory_space<vmem>>, vector<8x48xf32>
    tpu.vector_store %arg4[%c0_6, %c0_7], %4 {strides = array<i32>} : memref<8x48xf32, #tpu.memory_space<vmem>>, vector<8x48xf32>,
    return
  }
  func.func @transform_0(%arg0: i32) -> (i32, i32) {
    %c0_i32 = arith.constant 0 : i32
    %c0_i32_0 = arith.constant 0 : i32
    return %c0_i32, %arg0 : i32, i32
  }
  func.func @transform_1(%arg0: i32) -> (i32, i32) {
    %c0_i32 = arith.constant 0 : i32
    %c0_i32_0 = arith.constant 0 : i32
    %c0_i32_1 = arith.constant 0 : i32
    return %c0_i32, %c0_i32_0 : i32, i32
  }
  func.func @transform_2(%arg0: i32) -> (i32, i32) {
    %c0_i32 = arith.constant 0 : i32
    %c0_i32_0 = arith.constant 0 : i32
    %c0_i32_1 = arith.constant 0 : i32
    return %c0_i32, %c0_i32_0 : i32, i32
  }
  func.func @transform_3(%arg0: i32) -> (i32, i32) {
    %c0_i32 = arith.constant 0 : i32
    %c0_i32_0 = arith.constant 0 : i32
    return %c0_i32, %arg0 : i32, i32
  }
}

</mosaic_0001>

<llo_original>
// kernel: tpu_custom_call.1
$region0: #{tpu_custom_call.1}
  #allocation0 [shape = 'u32[]', space=smem, size = 0x4, offset = 0x4, fixed_abs, tag = 'smem constant byte address 0x4 - core index']
  #allocation1 [shape = 'u32[144,128]{1,0:T(1,128)}', space=vmem, size = 0x12000, scoped, tag = 'internal scratch']
  %s0 = inlined_call_operand.vmem [shape: f32[16,96], index: 0, kind: input, shape index: {}]
  %s1 = inlined_call_operand.vmem [shape: f32[8,16], index: 1, kind: input, shape index: {}]
  %s2 = inlined_call_operand.vmem [shape: f32[96,48], index: 2, kind: input, shape index: {}]
  %s3 = inlined_call_operand.hbm [shape: f32[8,48], index: 3, kind: output, shape index: {}]
  %s4 = sld [smem:[#allocation0]]
  $region22: #{tpu_custom_call.1} parent=0
    _
  %s6 = ssub.s32 1, %s4
  %s7 = scalar_select 0, %s6, %s4
  $region1: #{tpu_custom_call.1} parent=0
    #allocation2 [shape = 'u8[4096]{0}', space=vmem, size = 0x1000, scoped, tag = 'output window, operand 0, single buffered']
    #allocation3 [shape = 's32[1]{0}', space=sflag, size = 0x4, scoped, tag = 'scoped memory for tpu_custom_call.1']
    %8 = vsyncpa [#allocation3], 0
    // Predicated region
    $region2: #{tpu_custom_call.1} parent=1 // pred_check
      _
    $region3: #{tpu_custom_call.1} parent=1 // pred_check_branch
      %10 = sbr.rel (0) target = $region5
    $region4: #{tpu_custom_call.1} parent=1 // pred_region
      _
    $region5: #{tpu_custom_call.1} parent=1 // pred_fallthru
      _
    // Predicated region
    $region6: #{tpu_custom_call.1} parent=1 // pred_check
      _
    $region7: #{tpu_custom_call.1} parent=1 // pred_check_branch
      %12 = sbr.rel (0) target = $region9
    $region8: #{tpu_custom_call.1} parent=1 // pred_region
      _
    $region9: #{tpu_custom_call.1} parent=1 // pred_fallthru
      _
    // Predicated region
    $region10: #{tpu_custom_call.1} parent=1 // pred_check
      _
    $region11: #{tpu_custom_call.1} parent=1 // pred_check_branch
      %14 = sbr.rel (0) target = $region13
    $region12: #{tpu_custom_call.1} parent=1 // pred_region
      _
    $region13: #{tpu_custom_call.1} parent=1 // pred_fallthru
      _
    %v15 = vld [vmem:[%s1] sm:$0xff]
    %v16 = vld [vmem:[%s0] sm:$0xff]
    %v17 = vld [vmem:[%s0 + $0x8] sm:$0xff]
    %vm18 = vcmask 130048
    %v20 = vsel %vm18, %v15, 0
    %22 = vmatprep.subr.mxu0 0.0
    %23 = vmatpush1.msra.mxu0 %v16
    %24 = vmatprep.subr.mxu0 0.0
    %25 = vmatpush1.msra.mxu0 %v17
    %26 = vmatprep.subr.mxu0 0.0
    %27 = vmatpush1.msra.mxu0 0.0
    %28 = vmatprep.subr.mxu0 0.0
    %29 = vmatpush1.msra.mxu0 0.0
    %30 = vmatprep.subr.mxu0 0.0
    %31 = vmatpush1.msra.mxu0 0.0
    %32 = vmatprep.subr.mxu0 0.0
    %33 = vmatpush1.msra.mxu0 0.0
    %34 = vmatprep.subr.mxu0 0.0
    %35 = vmatpush1.msra.mxu0 0.0
    %36 = vmatprep.subr.mxu0 0.0
    %37 = vmatpush1.msra.mxu0 0.0
    %38 = vmatprep.subr.mxu0 0.0
    %39 = vmatpush1.msra.mxu0 0.0
    %40 = vmatprep.subr.mxu0 0.0
    %41 = vmatpush1.msra.mxu0 0.0
    %42 = vmatprep.subr.mxu0 0.0
    %43 = vmatpush1.msra.mxu0 0.0
    %44 = vmatprep.subr.mxu0 0.0
    %45 = vmatpush1.msra.mxu0 0.0
    %46 = vmatprep.subr.mxu0 0.0
    %47 = vmatpush1.msra.mxu0 0.0
    %48 = vmatprep.subr.mxu0 0.0
    %49 = vmatpush1.msra.mxu0 0.0
    %50 = vmatprep.subr.mxu0 0.0
    %51 = vmatpush1.msra.mxu0 0.0
    %52 = vmatprep.subr.mxu0 0.0
    %53 = vmatpush1.msra.mxu0 0.0
    %54 = vmatprep.subr.mxu0 0.0
    %55 = vmatpush1.msra.mxu0 0.0
    %56 = vmatprep.subr.mxu0 0.0
    %57 = vmatpush1.msra.mxu0 0.0
    %58 = vmatprep.subr.mxu0 0.0
    %59 = vmatpush1.msra.mxu0 0.0
    %60 = vmatprep.subr.mxu0 0.0
    %61 = vmatpush1.msra.mxu0 0.0
    %62 = vmatprep.subr.mxu0 0.0
    %63 = vmatpush1.msra.mxu0 0.0
    %64 = vmatprep.subr.mxu0 0.0
    %65 = vmatpush1.msra.mxu0 0.0
    %66 = vmatprep.subr.mxu0 0.0
    %67 = vmatpush1.msra.mxu0 0.0
    %68 = vmatprep.subr.mxu0 0.0
    %69 = vmatpush1.msra.mxu0 0.0
    %70 = vmatprep.subr.mxu0 0.0
    %71 = vmatpush1.msra.mxu0 0.0
    %72 = vmatprep.subr.mxu0 0.0
    %73 = vmatpush1.msra.mxu0 0.0
    %74 = vmatprep.subr.mxu0 0.0
    %75 = vmatpush1.msra.mxu0 0.0
    %76 = vmatprep.subr.mxu0 0.0
    %77 = vmatpush1.msra.mxu0 0.0
    %78 = vmatprep.subr.mxu0 0.0
    %79 = vmatpush1.msra.mxu0 0.0
    %80 = vmatprep.subr.mxu0 0.0
    %81 = vmatpush1.msra.mxu0 0.0
    %82 = vmatprep.subr.mxu0 0.0
    %83 = vmatpush1.msra.mxu0 0.0
    %84 = vmatprep.subr.mxu0 0.0
    %85 = vmatpush1.msra.mxu0 0.0
    %86 = vmatprep.mubr.f32.mxu0 0.0
    %87 = vmatmul.mubr.f32.gmra.mrb[0].mxu0 %v20
    %v88 = vpop.f32.mrb[0].mxu0
    %v89 = vadd.f32 0.0, %v88
    %v90 = vpop.f32.mrb[0].mxu0
    %91 = vdwg.mxu0
    %v92 = vld [vmem:[%s2] sm:$0xff]
    %v93 = vld [vmem:[%s2 + $0x8] sm:$0xff]
    %v94 = vld [vmem:[%s2 + $0x10] sm:$0xff]
    %v95 = vld [vmem:[%s2 + $0x18] sm:$0xff]
    %v96 = vld [vmem:[%s2 + $0x20] sm:$0xff]
    %v97 = vld [vmem:[%s2 + $0x28] sm:$0xff]
    %v98 = vld [vmem:[%s2 + $0x30] sm:$0xff]
    %v99 = vld [vmem:[%s2 + $0x38] sm:$0xff]
    %v100 = vld [vmem:[%s2 + $0x40] sm:$0xff]
    %v101 = vld [vmem:[%s2 + $0x48] sm:$0xff]
    %v102 = vld [vmem:[%s2 + $0x50] sm:$0xff]
    %v103 = vld [vmem:[%s2 + $0x58] sm:$0xff]
    %vm104 = vcmask 785408
    %v106 = vsel %vm104, %v89, 0
    %108 = vmatprep.subr.mxu0 0.0
    %109 = vmatpush1.msra.mxu0 %v92
    %110 = vmatprep.subr.mxu0 0.0
    %111 = vmatpush1.msra.mxu0 %v93
    %112 = vmatprep.subr.mxu0 0.0
    %113 = vmatpush1.msra.mxu0 %v94
    %114 = vmatprep.subr.mxu0 0.0
    %115 = vmatpush1.msra.mxu0 %v95
    %116 = vmatprep.subr.mxu0 0.0
    %117 = vmatpush1.msra.mxu0 %v96
    %118 = vmatprep.subr.mxu0 0.0
    %119 = vmatpush1.msra.mxu0 %v97
    %120 = vmatprep.subr.mxu0 0.0
    %121 = vmatpush1.msra.mxu0 %v98
    %122 = vmatprep.subr.mxu0 0.0
    %123 = vmatpush1.msra.mxu0 %v99
    %124 = vmatprep.subr.mxu0 0.0
    %125 = vmatpush1.msra.mxu0 %v100
    %126 = vmatprep.subr.mxu0 0.0
    %127 = vmatpush1.msra.mxu0 %v101
    %128 = vmatprep.subr.mxu0 0.0
    %129 = vmatpush1.msra.mxu0 %v102
    %130 = vmatprep.subr.mxu0 0.0
    %131 = vmatpush1.msra.mxu0 %v103
    %132 = vmatprep.subr.mxu0 0.0
    %133 = vmatpush1.msra.mxu0 0.0
    %134 = vmatprep.subr.mxu0 0.0
    %135 = vmatpush1.msra.mxu0 0.0
    %136 = vmatprep.subr.mxu0 0.0
    %137 = vmatpush1.msra.mxu0 0.0
    %138 = vmatprep.subr.mxu0 0.0
    %139 = vmatpush1.msra.mxu0 0.0
    %140 = vmatprep.subr.mxu0 0.0
    %141 = vmatpush1.msra.mxu0 0.0
    %142 = vmatprep.subr.mxu0 0.0
    %143 = vmatpush1.msra.mxu0 0.0
    %144 = vmatprep.subr.mxu0 0.0
    %145 = vmatpush1.msra.mxu0 0.0
    %146 = vmatprep.subr.mxu0 0.0
    %147 = vmatpush1.msra.mxu0 0.0
    %148 = vmatprep.subr.mxu0 0.0
    %149 = vmatpush1.msra.mxu0 0.0
    %150 = vmatprep.subr.mxu0 0.0
    %151 = vmatpush1.msra.mxu0 0.0
    %152 = vmatprep.subr.mxu0 0.0
    %153 = vmatpush1.msra.mxu0 0.0
    %154 = vmatprep.subr.mxu0 0.0
    %155 = vmatpush1.msra.mxu0 0.0
    %156 = vmatprep.subr.mxu0 0.0
    %157 = vmatpush1.msra.mxu0 0.0
    %158 = vmatprep.subr.mxu0 0.0
    %159 = vmatpush1.msra.mxu0 0.0
    %160 = vmatprep.subr.mxu0 0.0
    %161 = vmatpush1.msra.mxu0 0.0
    %162 = vmatprep.subr.mxu0 0.0
    %163 = vmatpush1.msra.mxu0 0.0
    %164 = vmatprep.subr.mxu0 0.0
    %165 = vmatpush1.msra.mxu0 0.0
    %166 = vmatprep.subr.mxu0 0.0
    %167 = vmatpush1.msra.mxu0 0.0
    %168 = vmatprep.subr.mxu0 0.0
    %169 = vmatpush1.msra.mxu0 0.0
    %170 = vmatprep.subr.mxu0 0.0
    %171 = vmatpush1.msra.mxu0 0.0
    %172 = vmatprep.mubr.f32.mxu0 0.0
    %173 = vmatmul.mubr.f32.gmra.mrb[0].mxu0 %v106
    %v174 = vpop.f32.mrb[0].mxu0
    %v175 = vadd.f32 0.0, %v174
    %v176 = vpop.f32.mrb[0].mxu0
    %177 = vdwg.mxu0
    %vm178 = vcmask 392192
    %179 = vst.msk [vmem:[#allocation2] sm:$0xff] %vm178, %v175
    // Predicated region
    $region14: #{tpu_custom_call.1} parent=1 // pred_check
      _
    $region15: #{tpu_custom_call.1} parent=1 // pred_check_branch
      %181 = sbr.rel (0) target = $region17
    $region16: #{tpu_custom_call.1} parent=1 // pred_region
      %s183 = ssub.s32 128, 128
      %184 = vsyncadd [#allocation3], %s183
      %s186 = sshll.u32 [#allocation2], 4
      %s187 = int_to_ptr.vmem [resolvable:$true] %s186
      %189 = dma.vmem_to_hbm [thread:$0]  %s187, 128, %s3, [#allocation3]
    $region17: #{tpu_custom_call.1} parent=1 // pred_fallthru
      _
    // Predicated region
    $region18: #{tpu_custom_call.1} parent=1 // pred_check
      _
    $region19: #{tpu_custom_call.1} parent=1 // pred_check_branch
      %191 = sbr.rel (0) target = $region21
    $region20: #{tpu_custom_call.1} parent=1 // pred_region
      %192 = dma.done [#allocation3], 128
    $region21: #{tpu_custom_call.1} parent=1 // pred_fallthru
      _
    %193 = vsyncpa [#allocation3], 1

</llo_original>
